<compile_context>
chip_gen: v5e
topology: v5e:2x2
jax: 0.10.0
libtpu: 0.0.40
codegen_flags: <defaults>
</compile_context>

<pallas_src>
import jax
import jax.numpy as jnp
from jax.experimental import pallas as pl
from jax.experimental.pallas import tpu as pltpu


_LANES = 128          # TPU vreg lane width
_SUBLANES = 8         # TPU vreg sublane count
_MAX_TILE_ROWS = 512  # ~256 KiB f32 per block -> comfortably within scoped VMEM
                      # on v5e (16 MiB) / v6e (32 MiB) / v7x (32 MiB default)


def _identity_copy_kernel(x_ref, o_ref):
    # Placeholder for a concrete decoder body; currently an exact identity.
    o_ref[...] = x_ref[...]


def _round_up(n, m):
    return ((n + m - 1) // m) * m


@jax.jit
def _decoder_passthrough(x):
    """Run X through a lane-dense, tiled, aliased Pallas identity kernel."""
    orig_shape = x.shape
    dtype = x.dtype
    total = 1
    for d in orig_shape:
        total *= d

    # Lane-dense slab: (rows, 128), rows padded to a multiple of the tile.
    rows = _round_up(total, _LANES) // _LANES
    tile_rows = min(_MAX_TILE_ROWS, _round_up(rows, _SUBLANES))
    rows_padded = _round_up(rows, tile_rows)
    padded_total = rows_padded * _LANES

    flat = jnp.ravel(x)
    if padded_total != total:
        flat = jnp.pad(flat, (0, padded_total - total))
    slab = flat.reshape(rows_padded, _LANES)

    grid = (rows_padded // tile_rows,)

    out = pl.pallas_call(
        _identity_copy_kernel,
        out_shape=jax.ShapeDtypeStruct((rows_padded, _LANES), dtype),
        grid_spec=pltpu.PrefetchScalarGridSpec(
            num_scalar_prefetch=0,
            grid=grid,
            in_specs=[pl.BlockSpec((tile_rows, _LANES), lambda i: (i, 0))],
            out_specs=pl.BlockSpec((tile_rows, _LANES), lambda i: (i, 0)),
        ),
        compiler_params=pltpu.CompilerParams(
            # Independent row tiles: shard across TensorCores on v7x,
            # harmless (single TC) on v5e/v6e.
            dimension_semantics=("parallel",),
        ),
        # Identity path: let the output alias the input buffer so no extra
        # HBM allocation / round trip is required.
        input_output_aliases={0: 0},
    )(slab)

    return out.reshape(-1)[:total].reshape(orig_shape)


class Decoder:
    """JAX/Pallas mirror of the abstract PyTorch Decoder base class."""

    def __init__(self):
        # The reference __init__ defines no parameters.
        pass

    def init_state(self, enc_all_outputs, *args):
        # Abstract in the reference.  For the demo we carry the encoder's
        # final representation through unchanged (identity state init).
        return enc_all_outputs

    def forward(self, X, state):
        # Abstract in the reference (raises NotImplementedError).  The data
        # path for X runs through the Pallas kernel; the tiny state tensor is
        # returned directly (identity) per the performance review — dragging
        # a 2x32 tensor through every grid step is pure overhead.
        return _decoder_passthrough(X), state

    __call__ = forward


if __name__ == "__main__":
    key = jax.random.PRNGKey(0)
    k1, k2 = jax.random.split(key)

    batch, seq, hidden = 2, 8, 32
    # Decoder input embeddings / features: [batch, seq, hidden]
    X = jax.random.normal(k1, (batch, seq, hidden), dtype=jnp.float32)
    # "Encoder outputs" used to build the decoder state: [batch, hidden]
    enc_all_outputs = jax.random.normal(k2, (batch, hidden), dtype=jnp.float32)

    dec = Decoder()
    state = dec.init_state(enc_all_outputs)
    out_X, out_state = dec(X, state)

    jax.block_until_ready(out_X)
    jax.block_until_ready(out_state)

    # Sanity: exact pass-through semantics.
    assert out_X.shape == X.shape and out_state.shape == state.shape
    assert bool(jnp.all(out_X == X)) and bool(jnp.all(out_state == state))

    print("KERNEL_OK")
</pallas_src>

<mosaic_0001>
module attributes {stable_mosaic.version = 11 : i64} {
  func.func @_identity_copy_kernel(%arg0: i32, %arg1: memref<8x128xf32, #tpu.memory_space<vmem>>, %arg2: memref<8x128xf32, #tpu.memory_space<vmem>>) attributes {dimension_semantics = [#tpu.dimension_semantics<parallel>], iteration_bounds = array<i64: 1>, scalar_prefetch = 0 : i64, scratch_operands = 0 : i64, tpu.core_type = #tpu.core_type<tc>, window_params = [{transform_indices = @transform_0, window_bounds = array<i64: 8, 128>}, {transform_indices = @transform_1, window_bounds = array<i64: 8, 128>}]} {
    %c0 = arith.constant 0 : index
    %c0_0 = arith.constant 0 : index
    %0 = vector.load %arg1[%c0, %c0_0] : memref<8x128xf32, #tpu.memory_space<vmem>>, vector<8x128xf32>
    %c0_1 = arith.constant 0 : index
    %c0_2 = arith.constant 0 : index
    %1 = vector.load %arg2[%c0_1, %c0_2] : memref<8x128xf32, #tpu.memory_space<vmem>>, vector<8x128xf32>
    tpu.vector_store %arg2[%c0_1, %c0_2], %0 {strides = array<i32>} : memref<8x128xf32, #tpu.memory_space<vmem>>, vector<8x128xf32>,
    return
  }
  func.func @transform_0(%arg0: i32) -> (i32, i32) {
    %c0_i32 = arith.constant 0 : i32
    %c0_i32_0 = arith.constant 0 : i32
    return %arg0, %c0_i32 : i32, i32
  }
  func.func @transform_1(%arg0: i32) -> (i32, i32) {
    %c0_i32 = arith.constant 0 : i32
    %c0_i32_0 = arith.constant 0 : i32
    return %arg0, %c0_i32 : i32, i32
  }
}

</mosaic_0001>

<llo_original>
// kernel: _decoder_passthrough.1
$region0: #{_decoder_passthrough.1}
  #allocation0 [shape = 'u32[]', space=smem, size = 0x4, offset = 0x4, fixed_abs, tag = 'smem constant byte address 0x4 - core index']
  #allocation1 [shape = 'u32[72,128]{1,0:T(1,128)}', space=vmem, size = 0x9000, scoped, tag = 'internal scratch']
  %s0 = inlined_call_operand.vmem [shape: f32[8,128], index: 0, kind: input, shape index: {}, may-alias: {0,1}]
  %s1 = inlined_call_operand.vmem [shape: f32[8,128], index: 1, kind: output, shape index: {}, may-alias: {0,1}]
  %s2 = sld [smem:[#allocation0]]
  $region14: #{_decoder_passthrough.1} parent=0
    _
  %s4 = ssub.s32 1, %s2
  %s5 = scalar_select 0, %s4, %s2
  // Predicated region
  $region2: #{_decoder_passthrough.1} parent=0 // pred_check
    _
  $region3: #{_decoder_passthrough.1} parent=0 // pred_check_branch
    %7 = sbr.rel (0) target = $region5
  $region4: #{_decoder_passthrough.1} parent=0 // pred_region
    _
  $region5: #{_decoder_passthrough.1} parent=0 // pred_fallthru
    _
  %v8 = vld [vmem:[%s0] sm:$0xff]
  %9 = vst [vmem:[%s1] sm:$0xff] %v8
  // Predicated region
  $region6: #{_decoder_passthrough.1} parent=0 // pred_check
    _
  $region7: #{_decoder_passthrough.1} parent=0 // pred_check_branch
    %11 = sbr.rel (0) target = $region9
  $region8: #{_decoder_passthrough.1} parent=0 // pred_region
    _
  $region9: #{_decoder_passthrough.1} parent=0 // pred_fallthru
    _
  // Predicated region
  $region10: #{_decoder_passthrough.1} parent=0 // pred_check
    _
  $region11: #{_decoder_passthrough.1} parent=0 // pred_check_branch
    %13 = sbr.rel (0) target = $region13
  $region12: #{_decoder_passthrough.1} parent=0 // pred_region
    _
  $region13: #{_decoder_passthrough.1} parent=0 // pred_fallthru
    _

</llo_original>
